<compile_context>
chip_gen: v5e
topology: v5e:2x2
jax: 0.10.0
libtpu: 0.0.40
codegen_flags: <defaults>
</compile_context>

<pallas_src>
import functools
import math

import jax
import jax.numpy as jnp
from jax import lax
from jax.experimental import pallas as pl
from jax.experimental.pallas import tpu as pltpu


def _pick_tile(dim, pref, align):
    """Largest tile <= pref that is a multiple of `align` and divides `dim`.
    Falls back to the full dimension (always a legal Pallas block)."""
    if dim <= pref:
        return dim
    t = (pref // align) * align
    while t >= align:
        if dim % t == 0:
            return t
        t -= align
    return dim


def _lora_proj_kernel(idx_ref,                          # scalar-prefetch (SMEM)
                      x_ref, w_ref, b_ref, a_ref, bT_ref,   # inputs
                      o_ref,                                # output
                      acc_ref, u_ref,                       # VMEM scratch
                      *, reuse_down):
    # x_ref : (tm, tk)   w_ref : (tn, tk)   b_ref : (1, tn)
    # a_ref : (r, tk)    bT_ref: (tn, r)    o_ref : (tm, tn)
    # acc_ref: (tm, tn) f32   u_ref: (tm, r) f32
    del idx_ref  # only consumed by the index_maps
    j = pl.program_id(1)
    k = pl.program_id(2)

    @pl.when(k == 0)
    def _init_acc():
        acc_ref[...] = jnp.zeros_like(acc_ref)

    x = x_ref[...]
    # frozen linear path: x @ W.T  (contract the K axis of both operands)
    acc_ref[...] += lax.dot_general(
        x, w_ref[...], (((1,), (1,)), ((), ())),
        preferred_element_type=jnp.float32)

    if reuse_down:
        # LoRA down-projection x @ A[idx].T only depends on (i, k): compute it
        # once at j == 0 and reuse the persistent scratch for all later j.
        @pl.when(jnp.logical_and(j == 0, k == 0))
        def _init_u():
            u_ref[...] = jnp.zeros_like(u_ref)

        @pl.when(j == 0)
        def _down():
            u_ref[...] += lax.dot_general(
                x, a_ref[...], (((1,), (1,)), ((), ())),
                preferred_element_type=jnp.float32)
    else:
        @pl.when(k == 0)
        def _init_u():
            u_ref[...] = jnp.zeros_like(u_ref)

        u_ref[...] += lax.dot_general(
            x, a_ref[...], (((1,), (1,)), ((), ())),
            preferred_element_type=jnp.float32)

    @pl.when(k == pl.num_programs(2) - 1)
    def _finalize():
        # LoRA up-projection u @ B[idx].T and bias are applied exactly once.
        lora = lax.dot_general(
            u_ref[...], bT_ref[...], (((1,), (1,)), ((), ())),
            preferred_element_type=jnp.float32)
        o_ref[...] = (acc_ref[...] + b_ref[...] + lora).astype(o_ref.dtype)


def lora_proj(x, weight, bias, lora_A_stack, lora_B_stack, idx,
              *, tile_m=256, tile_n=512, tile_k=512,
              compute_dtype=None, out_dtype=None):
    """Fused LoRA projection: x @ W.T + bias + (x @ A[idx].T) @ B[idx].T.

    x:             (..., in_features)
    weight:        (out_features, in_features)      -- original nn.Linear layout
    bias:          (out_features,)
    lora_A_stack:  (num_adapters, r, in_features)
    lora_B_stack:  (num_adapters, out_features, r)
    idx:           adapter index (python int or int32 scalar/array -> adapters
                   can be hot-swapped without retracing when passed on-device)
    """
    orig_shape = x.shape
    K = orig_shape[-1]
    M = math.prod(orig_shape[:-1])
    N, Kw = weight.shape
    assert Kw == K
    num_adapters, r, _ = lora_A_stack.shape

    if out_dtype is None:
        out_dtype = x.dtype

    x2 = x.reshape(M, K)
    if compute_dtype is not None:
        x2 = x2.astype(compute_dtype)
        weight = weight.astype(compute_dtype)
        lora_A_stack = lora_A_stack.astype(compute_dtype)
        lora_B_stack = lora_B_stack.astype(compute_dtype)
    b2 = bias.reshape(1, N).astype(jnp.float32)   # bias added in the f32 epilogue

    idx_arr = jnp.asarray(idx, dtype=jnp.int32).reshape(1)

    # Lane-dense / sublane-aligned tiles; full-dim fallback keeps toy shapes legal.
    tm = _pick_tile(M, tile_m, 8)
    tn = _pick_tile(N, tile_n, 128)
    tk = _pick_tile(K, tile_k, 128)
    grid = (M // tm, N // tn, K // tk)

    # Reuse the down-projection across j only when there is >1 column tile AND
    # the row axis still gives megacore something to split on.  Reuse forces
    # the j axis to be sequential ("arbitrary").
    reuse_down = (grid[1] > 1) and (grid[0] >= 2)
    if reuse_down:
        dims = ("parallel", "arbitrary", "arbitrary")
    else:
        dims = ("parallel", "parallel", "arbitrary")

    in_bytes = jnp.dtype(x2.dtype).itemsize
    cost = pl.CostEstimate(
        flops=2 * M * N * K + 2 * M * r * K + 2 * M * r * N,
        transcendentals=0,
        bytes_accessed=(M * K + N * K + r * K + N * r) * in_bytes
                       + N * 4 + M * N * jnp.dtype(out_dtype).itemsize,
    )

    grid_spec = pltpu.PrefetchScalarGridSpec(
        num_scalar_prefetch=1,           # idx lands in SMEM, feeds the index_maps
        grid=grid,
        in_specs=[
            pl.BlockSpec((tm, tk), lambda i, j, k, idx_ref: (i, k)),          # x
            pl.BlockSpec((tn, tk), lambda i, j, k, idx_ref: (j, k)),          # W (out,in)
            pl.BlockSpec((1, tn), lambda i, j, k, idx_ref: (0, j)),           # bias
            pl.BlockSpec((None, r, tk),                                       # A[idx]
                         lambda i, j, k, idx_ref: (idx_ref[0], 0, k)),
            pl.BlockSpec((None, tn, r),                                       # B[idx]
                         lambda i, j, k, idx_ref: (idx_ref[0], j, 0)),
        ],
        out_specs=pl.BlockSpec((tm, tn), lambda i, j, k, idx_ref: (i, j)),
        scratch_shapes=[
            pltpu.VMEM((tm, tn), jnp.float32),   # main accumulator
            pltpu.VMEM((tm, r), jnp.float32),    # LoRA down-proj accumulator
        ],
    )

    out2 = pl.pallas_call(
        functools.partial(_lora_proj_kernel, reuse_down=reuse_down),
        out_shape=jax.ShapeDtypeStruct((M, N), out_dtype),
        grid_spec=grid_spec,
        compiler_params=pltpu.CompilerParams(
            dimension_semantics=dims,
            vmem_limit_bytes=48 * 1024 * 1024,
        ),
        cost_estimate=cost,
    )(idx_arr, x2, weight, b2, lora_A_stack, lora_B_stack)

    return out2.reshape(*orig_shape[:-1], N)


def _reference(x, weight, bias, A_stack, B_stack, idx):
    hp = jax.lax.Precision.HIGHEST
    lin = jnp.einsum("...k,nk->...n", x, weight, precision=hp) + bias
    u = jnp.einsum("...k,rk->...r", x, A_stack[idx], precision=hp)
    return lin + jnp.einsum("...r,nr->...n", u, B_stack[idx], precision=hp)


if __name__ == "__main__":
    # --- small shapes consistent with the module: batch=2, seq=8, hidden=32, r=4 ---
    batch, seq = 2, 8
    in_features, out_features, r = 32, 32, 4
    num_adapters = 4

    key = jax.random.PRNGKey(0)
    kx, kw, kb, ka, kbb = jax.random.split(key, 5)

    x = jax.random.normal(kx, (batch, seq, in_features), dtype=jnp.float32)
    bound = 1.0 / math.sqrt(in_features)
    weight = jax.random.uniform(kw, (out_features, in_features),
                                minval=-bound, maxval=bound, dtype=jnp.float32)
    bias = jax.random.uniform(kb, (out_features,),
                              minval=-bound, maxval=bound, dtype=jnp.float32)
    # kaiming_uniform_(a=sqrt(5)) -> uniform(-1/sqrt(in), 1/sqrt(in))
    lora_A = jax.random.uniform(ka, (num_adapters, r, in_features),
                                minval=-bound, maxval=bound, dtype=jnp.float32)
    # reset_parameters() zeros lora_B; nonzero here so the LoRA path is exercised.
    lora_B = 0.1 * jax.random.normal(kbb, (num_adapters, out_features, r),
                                     dtype=jnp.float32)
    idx = 2

    out = lora_proj(x, weight, bias, lora_A, lora_B, idx)
    jax.block_until_ready(out)
    ref = _reference(x, weight, bias, lora_A, lora_B, idx)
    assert out.shape == ref.shape
    assert jnp.allclose(out, ref, atol=2e-3, rtol=2e-3), "small-shape f32 mismatch"

    # --- bf16 compute path (f32 accumulation), as recommended for v6e/v7x MXU ---
    out_bf16 = lora_proj(x, weight, bias, lora_A, lora_B, idx,
                         compute_dtype=jnp.bfloat16)
    jax.block_until_ready(out_bf16)
    assert jnp.allclose(out_bf16, ref, atol=5e-2, rtol=5e-2), "bf16 compute mismatch"

    # --- medium shapes: exercise the multi-step (i, j, k) grid, the epilogue,
    #     and the j==0 down-projection-reuse path (grid = (2, 3, 2)) ---
    b2n, s2n, K2, N2, r2 = 2, 64, 256, 384, 8
    k2x, k2w, k2b, k2a, k2bb = jax.random.split(jax.random.PRNGKey(1), 5)
    x_m = jax.random.normal(k2x, (b2n, s2n, K2), dtype=jnp.float32)
    bound2 = 1.0 / math.sqrt(K2)
    w_m = jax.random.uniform(k2w, (N2, K2), minval=-bound2, maxval=bound2, dtype=jnp.float32)
    b_m = jax.random.uniform(k2b, (N2,), minval=-bound2, maxval=bound2, dtype=jnp.float32)
    a_m = jax.random.uniform(k2a, (num_adapters, r2, K2),
                             minval=-bound2, maxval=bound2, dtype=jnp.float32)
    bb_m = 0.1 * jax.random.normal(k2bb, (num_adapters, N2, r2), dtype=jnp.float32)
    idx_m = jnp.asarray(1, dtype=jnp.int32)   # device int32: adapter swap w/o recompile

    out_m = lora_proj(x_m, w_m, b_m, a_m, bb_m, idx_m,
                      tile_m=64, tile_n=128, tile_k=128)   # grid = (2, 3, 2)
    jax.block_until_ready(out_m)
    ref_m = _reference(x_m, w_m, b_m, a_m, bb_m, 1)
    assert jnp.allclose(out_m, ref_m, atol=2e-3, rtol=2e-3), "medium-shape tiled mismatch"

    print("KERNEL_OK")
</pallas_src>

<mosaic_0001>
module attributes {stable_mosaic.version = 11 : i64} {
  func.func @_lora_proj_kernel(%arg0: i32, %arg1: i32, %arg2: i32, %arg3: memref<1xi32, #tpu.memory_space<smem>>, %arg4: memref<16x32xf32, #tpu.memory_space<vmem>>, %arg5: memref<32x32xf32, #tpu.memory_space<vmem>>, %arg6: memref<1x32xf32, #tpu.memory_space<vmem>>, %arg7: memref<1x4x32xf32, #tpu.memory_space<vmem>>, %arg8: memref<1x32x4xf32, #tpu.memory_space<vmem>>, %arg9: memref<16x32xf32, #tpu.memory_space<vmem>>, %arg10: memref<16x32xf32, #tpu.memory_space<vmem>>, %arg11: memref<16x4xf32, #tpu.memory_space<vmem>>) attributes {dimension_semantics = [#tpu.dimension_semantics<parallel>, #tpu.dimension_semantics<parallel>, #tpu.dimension_semantics<arbitrary>], iteration_bounds = array<i64: 1, 1, 1>, scalar_prefetch = 1 : i64, scratch_operands = 2 : i64, tpu.core_type = #tpu.core_type<tc>, window_params = [{transform_indices = @transform_0, window_bounds = array<i64: 16, 32>}, {transform_indices = @transform_1, window_bounds = array<i64: 32, 32>}, {transform_indices = @transform_2, window_bounds = array<i64: 1, 32>}, {transform_indices = @transform_3, window_bounds = array<i64: 1, 4, 32>}, {transform_indices = @transform_4, window_bounds = array<i64: 1, 32, 4>}, {transform_indices = @transform_5, window_bounds = array<i64: 16, 32>}]} {
    %c0_i32 = arith.constant 0 : i32
    %0 = arith.cmpi eq, %arg2, %c0_i32 : i32
    %1 = arith.extui %0 : i1 to i32
    %c0_i32_0 = arith.constant 0 : i32
    %2 = arith.cmpi ne, %1, %c0_i32_0 : i32
    scf.if %2 {
      %cst_20 = arith.constant 0.000000e+00 : f32
      %21 = vector.broadcast %cst_20 : f32 to vector<16x32xf32>
      %c0_21 = arith.constant 0 : index
      %c0_22 = arith.constant 0 : index
      %22 = vector.load %arg10[%c0_21, %c0_22] : memref<16x32xf32, #tpu.memory_space<vmem>>, vector<16x32xf32>
      tpu.vector_store %arg10[%c0_21, %c0_22], %21 {strides = array<i32>} : memref<16x32xf32, #tpu.memory_space<vmem>>, vector<16x32xf32>,
    } else {
    }
    %c0 = arith.constant 0 : index
    %c0_1 = arith.constant 0 : index
    %3 = vector.load %arg4[%c0, %c0_1] : memref<16x32xf32, #tpu.memory_space<vmem>>, vector<16x32xf32>
    %c0_2 = arith.constant 0 : index
    %c0_3 = arith.constant 0 : index
    %4 = vector.load %arg10[%c0_2, %c0_3] : memref<16x32xf32, #tpu.memory_space<vmem>>, vector<16x32xf32>
    %c0_4 = arith.constant 0 : index
    %c0_5 = arith.constant 0 : index
    %5 = vector.load %arg5[%c0_4, %c0_5] : memref<32x32xf32, #tpu.memory_space<vmem>>, vector<32x32xf32>
    %cst = arith.constant dense<0.000000e+00> : vector<16x32xf32>
    %6 = tpu.matmul %3, %5, %cst {dimension_numbers = #tpu.dot_dimension_numbers<[1], [1], [0], [0], [0, 0, 1, 0], [], []>} : vector<16x32xf32>, vector<32x32xf32>, vector<16x32xf32> -> vector<16x32xf32>
    %7 = arith.addf %4, %6 : vector<16x32xf32>
    %c0_6 = arith.constant 0 : index
    %c0_7 = arith.constant 0 : index
    %8 = vector.load %arg10[%c0_6, %c0_7] : memref<16x32xf32, #tpu.memory_space<vmem>>, vector<16x32xf32>
    tpu.vector_store %arg10[%c0_6, %c0_7], %7 {strides = array<i32>} : memref<16x32xf32, #tpu.memory_space<vmem>>, vector<16x32xf32>,
    %c0_i32_8 = arith.constant 0 : i32
    %9 = arith.cmpi eq, %arg2, %c0_i32_8 : i32
    %10 = arith.extui %9 : i1 to i32
    %c0_i32_9 = arith.constant 0 : i32
    %11 = arith.cmpi ne, %10, %c0_i32_9 : i32
    scf.if %11 {
      %cst_20 = arith.constant 0.000000e+00 : f32
      %21 = vector.broadcast %cst_20 : f32 to vector<16x4xf32>
      %c0_21 = arith.constant 0 : index
      %c0_22 = arith.constant 0 : index
      %22 = vector.load %arg11[%c0_21, %c0_22] : memref<16x4xf32, #tpu.memory_space<vmem>>, vector<16x4xf32>
      tpu.vector_store %arg11[%c0_21, %c0_22], %21 {strides = array<i32>} : memref<16x4xf32, #tpu.memory_space<vmem>>, vector<16x4xf32>,
    } else {
    }
    %c0_10 = arith.constant 0 : index
    %c0_11 = arith.constant 0 : index
    %12 = vector.load %arg11[%c0_10, %c0_11] : memref<16x4xf32, #tpu.memory_space<vmem>>, vector<16x4xf32>
    %c0_12 = arith.constant 0 : index
    %c0_13 = arith.constant 0 : index
    %c0_14 = arith.constant 0 : index
    %13 = vector.load %arg7[%c0_12, %c0_13, %c0_14] : memref<1x4x32xf32, #tpu.memory_space<vmem>>, vector<1x4x32xf32>
    %14 = vector.shape_cast %13 : vector<1x4x32xf32> to vector<4x32xf32>
    %cst_15 = arith.constant dense<0.000000e+00> : vector<16x4xf32>
    %15 = tpu.matmul %3, %14, %cst_15 {dimension_numbers = #tpu.dot_dimension_numbers<[1], [1], [0], [0], [0, 0, 1, 0], [], []>} : vector<16x32xf32>, vector<4x32xf32>, vector<16x4xf32> -> vector<16x4xf32>
    %16 = arith.addf %12, %15 : vector<16x4xf32>
    %c0_16 = arith.constant 0 : index
    %c0_17 = arith.constant 0 : index
    %17 = vector.load %arg11[%c0_16, %c0_17] : memref<16x4xf32, #tpu.memory_space<vmem>>, vector<16x4xf32>
    tpu.vector_store %arg11[%c0_16, %c0_17], %16 {strides = array<i32>} : memref<16x4xf32, #tpu.memory_space<vmem>>, vector<16x4xf32>,
    %c0_i32_18 = arith.constant 0 : i32
    %18 = arith.cmpi eq, %arg2, %c0_i32_18 : i32
    %19 = arith.extui %18 : i1 to i32
    %c0_i32_19 = arith.constant 0 : i32
    %20 = arith.cmpi ne, %19, %c0_i32_19 : i32
    scf.if %20 {
      %c0_20 = arith.constant 0 : index
      %c0_21 = arith.constant 0 : index
      %21 = vector.load %arg11[%c0_20, %c0_21] : memref<16x4xf32, #tpu.memory_space<vmem>>, vector<16x4xf32>
      %c0_22 = arith.constant 0 : index
      %c0_23 = arith.constant 0 : index
      %c0_24 = arith.constant 0 : index
      %22 = vector.load %arg8[%c0_22, %c0_23, %c0_24] : memref<1x32x4xf32, #tpu.memory_space<vmem>>, vector<1x32x4xf32>
      %23 = vector.shape_cast %22 : vector<1x32x4xf32> to vector<32x4xf32>
      %cst_25 = arith.constant dense<0.000000e+00> : vector<16x32xf32>
      %24 = tpu.matmul %21, %23, %cst_25 {dimension_numbers = #tpu.dot_dimension_numbers<[1], [1], [0], [0], [0, 0, 1, 0], [], []>} : vector<16x4xf32>, vector<32x4xf32>, vector<16x32xf32> -> vector<16x32xf32>
      %c0_26 = arith.constant 0 : index
      %c0_27 = arith.constant 0 : index
      %25 = vector.load %arg10[%c0_26, %c0_27] : memref<16x32xf32, #tpu.memory_space<vmem>>, vector<16x32xf32>
      %c0_28 = arith.constant 0 : index
      %c0_29 = arith.constant 0 : index
      %26 = vector.load %arg6[%c0_28, %c0_29] : memref<1x32xf32, #tpu.memory_space<vmem>>, vector<1x32xf32>
      %27 = vector.broadcast %26 : vector<1x32xf32> to vector<16x32xf32>
      %28 = arith.addf %25, %27 : vector<16x32xf32>
      %29 = arith.addf %28, %24 : vector<16x32xf32>
      %c0_30 = arith.constant 0 : index
      %c0_31 = arith.constant 0 : index
      %30 = vector.load %arg9[%c0_30, %c0_31] : memref<16x32xf32, #tpu.memory_space<vmem>>, vector<16x32xf32>
      tpu.vector_store %arg9[%c0_30, %c0_31], %29 {strides = array<i32>} : memref<16x32xf32, #tpu.memory_space<vmem>>, vector<16x32xf32>,
    } else {
    }
    return
  }
  func.func @transform_0(%arg0: i32, %arg1: i32, %arg2: i32, %arg3: memref<1xi32, #tpu.memory_space<smem>>) -> (i32, i32) {
    %c0_i32 = arith.constant 0 : i32
    return %arg0, %arg2 : i32, i32
  }
  func.func @transform_1(%arg0: i32, %arg1: i32, %arg2: i32, %arg3: memref<1xi32, #tpu.memory_space<smem>>) -> (i32, i32) {
    %c0_i32 = arith.constant 0 : i32
    return %arg1, %arg2 : i32, i32
  }
  func.func @transform_2(%arg0: i32, %arg1: i32, %arg2: i32, %arg3: memref<1xi32, #tpu.memory_space<smem>>) -> (i32, i32) {
    %c0_i32 = arith.constant 0 : i32
    %c0_i32_0 = arith.constant 0 : i32
    return %c0_i32, %arg1 : i32, i32
  }
  func.func @transform_3(%arg0: i32, %arg1: i32, %arg2: i32, %arg3: memref<1xi32, #tpu.memory_space<smem>>) -> (i32, i32, i32) {
    %c0 = arith.constant 0 : index
    %0 = memref.load %arg3[%c0] : memref<1xi32, #tpu.memory_space<smem>>
    %c0_i32 = arith.constant 0 : i32
    %c0_i32_0 = arith.constant 0 : i32
    return %0, %c0_i32, %arg2 : i32, i32, i32
  }
  func.func @transform_4(%arg0: i32, %arg1: i32, %arg2: i32, %arg3: memref<1xi32, #tpu.memory_space<smem>>) -> (i32, i32, i32) {
    %c0 = arith.constant 0 : index
    %0 = memref.load %arg3[%c0] : memref<1xi32, #tpu.memory_space<smem>>
    %c0_i32 = arith.constant 0 : i32
    %c0_i32_0 = arith.constant 0 : i32
    return %0, %arg1, %c0_i32 : i32, i32, i32
  }
  func.func @transform_5(%arg0: i32, %arg1: i32, %arg2: i32, %arg3: memref<1xi32, #tpu.memory_space<smem>>) -> (i32, i32) {
    %c0_i32 = arith.constant 0 : i32
    return %arg0, %arg1 : i32, i32
  }
}

</mosaic_0001>

<llo_original>
// kernel: tpu_custom_call.1
$region0: #{tpu_custom_call.1}
  #allocation0 [shape = 'u32[]', space=smem, size = 0x4, offset = 0x4, fixed_abs, tag = 'smem constant byte address 0x4 - core index']
  #allocation1 [shape = 'u32[72,128]{1,0:T(1,128)}', space=vmem, size = 0x9000, scoped, tag = 'internal scratch']
  #allocation2 [shape = 'f32[16,32]{1,0:T(8,128)}', space=vmem, size = 0x2000, scoped, tag = 'scratch operand']
  #allocation3 [shape = 'f32[16,4]{1,0:T(8,128)}', space=vmem, size = 0x2000, scoped, tag = 'scratch operand']
  #allocation4 [shape = 's32[1]{0}', space=sflag, size = 0x4, scoped, tag = 'scoped memory for tpu_custom_call.1']
  #allocation5 [shape = 's32[1]{0:T(128)S(6)}', space=smem, size = 0x200, scoped, tag = 'prefetched SMEM operand 0']
  %s0 = inlined_call_operand.<no memory space> [shape: s32[1], index: 0, kind: input, shape index: {}]
  %s1 = inlined_call_operand.vmem [shape: f32[16,32], index: 1, kind: input, shape index: {}]
  %s2 = inlined_call_operand.vmem [shape: f32[32,32], index: 2, kind: input, shape index: {}]
  %s3 = inlined_call_operand.vmem [shape: f32[1,32], index: 3, kind: input, shape index: {}]
  %s4 = inlined_call_operand.vmem [shape: f32[4,4,32], index: 4, kind: input, shape index: {}]
  %s5 = inlined_call_operand.vmem [shape: f32[4,32,4], index: 5, kind: input, shape index: {}]
  %s6 = inlined_call_operand.hbm [shape: f32[16,32], index: 6, kind: output, shape index: {}]
  %s7 = sld [smem:[#allocation0]]
  $region42: #{tpu_custom_call.1} parent=0
    _
  %s9 = ssub.s32 1, %s7
  %s10 = scalar_select 0, %s9, %s7
  %11 = sst [smem:[#allocation5]] %s0
  $region1: #{tpu_custom_call.1} parent=0
    #allocation6 [shape = 'u8[8192]{0}', space=vmem, size = 0x2000, scoped, tag = 'output window, operand 0, single buffered']
    #allocation7 [shape = 's32[1]{0}', space=sflag, size = 0x4, scoped, tag = 'scoped memory for tpu_custom_call.1']
    %12 = vsyncpa [#allocation7], 0
    // Predicated region
    $region2: #{tpu_custom_call.1} parent=1 // pred_check
      _
    $region3: #{tpu_custom_call.1} parent=1 // pred_check_branch
      %14 = sbr.rel (0) target = $region5
    $region4: #{tpu_custom_call.1} parent=1 // pred_region
      _
    $region5: #{tpu_custom_call.1} parent=1 // pred_fallthru
      _
    // Predicated region
    $region6: #{tpu_custom_call.1} parent=1 // pred_check
      _
    $region7: #{tpu_custom_call.1} parent=1 // pred_check_branch
      %16 = sbr.rel (0) target = $region9
    $region8: #{tpu_custom_call.1} parent=1 // pred_region
      _
    $region9: #{tpu_custom_call.1} parent=1 // pred_fallthru
      _
    // Predicated region
    $region10: #{tpu_custom_call.1} parent=1 // pred_check
      _
    $region11: #{tpu_custom_call.1} parent=1 // pred_check_branch
      %18 = sbr.rel (0) target = $region13
    $region12: #{tpu_custom_call.1} parent=1 // pred_region
      _
    $region13: #{tpu_custom_call.1} parent=1 // pred_fallthru
      _
    // Predicated region
    $region14: #{tpu_custom_call.1} parent=1 // pred_check
      _
    $region15: #{tpu_custom_call.1} parent=1 // pred_check_branch
      %20 = sbr.rel (0) target = $region17
    $region16: #{tpu_custom_call.1} parent=1 // pred_region
      %s21 = sld [smem:[#allocation5]]
      %p22 = scmp.lt.s32.totalorder %s21, 3
      %s23 = scalar_select %p22, %s21, 3
      %s24 = smul.addr %s23, 4
      %s25 = scalar_lea.vmem %s4, %s24
      %s26 = sld [smem:[#allocation5]]
    $region17: #{tpu_custom_call.1} parent=1 // pred_fallthru
      _
    // Predicated region
    $region18: #{tpu_custom_call.1} parent=1 // pred_check
      _
    $region19: #{tpu_custom_call.1} parent=1 // pred_check_branch
      %28 = sbr.rel (0) target = $region21
    $region20: #{tpu_custom_call.1} parent=1 // pred_region
      %s29 = sld [smem:[#allocation5]]
      %p30 = scmp.lt.s32.totalorder %s29, 3
      %s31 = scalar_select %p30, %s29, 3
      %s32 = smul.addr %s31, 4
      %s33 = smul.addr %s32, 8
      %s34 = scalar_lea.vmem %s5, %s33
      %s35 = sld [smem:[#allocation5]]
    $region21: #{tpu_custom_call.1} parent=1 // pred_fallthru
      _
    %s36 = sld [smem:[#allocation5]]
    %p37 = scmp.lt.s32.totalorder %s36, 3
    %s38 = scalar_select %p37, %s36, 3
    %s39 = smul.addr %s38, 4
    %s40 = scalar_lea.vmem %s4, %s39
    %s41 = sld [smem:[#allocation5]]
    %p42 = scmp.lt.s32.totalorder %s41, 3
    %s43 = scalar_select %p42, %s41, 3
    %s44 = smul.addr %s43, 4
    %s45 = smul.addr %s44, 8
    %s46 = scalar_lea.vmem %s5, %s45
    %s47 = sld [smem:[#allocation5]]
    %p48 = scmp.lt.s32.totalorder %s47, 3
    %s49 = scalar_select %p48, %s47, 3
    %s50 = smul.addr %s49, 4
    %s51 = scalar_lea.vmem %s4, %s50
    %s52 = sld [smem:[#allocation5]]
    %s53 = sld [smem:[#allocation5]]
    %p54 = scmp.lt.s32.totalorder %s53, 3
    %s55 = scalar_select %p54, %s53, 3
    %s56 = smul.addr %s55, 4
    %s57 = smul.addr %s56, 8
    %s58 = scalar_lea.vmem %s5, %s57
    %s59 = sld [smem:[#allocation5]]
    %p60 = scmp.eq.s32.totalorder 0, 0
    // Predicated region
    $region22: #{tpu_custom_call.1} parent=1 // pred_check
      %p61 = pneg %p60
    $region23: #{tpu_custom_call.1} parent=1 // pred_check_branch
      %63 = sbr.rel (%p61) target = $region25
    $region24: #{tpu_custom_call.1} parent=1 // pred_region
      %vm64 = vcmask 261120
      %65 = vst.msk [vmem:[#allocation2] sm:$0xff] %vm64, 0.0
      %66 = vst.msk [vmem:[#allocation2 + $0x8] sm:$0xff] %vm64, 0.0
    $region25: #{tpu_custom_call.1} parent=1 // pred_fallthru
      _
    %v67 = vld [vmem:[%s1] sm:$0xff]
    %v68 = vld [vmem:[%s1 + $0x8] sm:$0xff]
    %v69 = vld [vmem:[#allocation2] sm:$0xff]
    %v70 = vld [vmem:[#allocation2 + $0x8] sm:$0xff]
    %v71 = vld [vmem:[%s2] sm:$0xff]
    %v72 = vld [vmem:[%s2 + $0x8] sm:$0xff]
    %v73 = vld [vmem:[%s2 + $0x10] sm:$0xff]
    %v74 = vld [vmem:[%s2 + $0x18] sm:$0xff]
    %vm75 = vcmask 261120
    %v77 = vsel %vm75, %v67, 0
    %v80 = vsel %vm75, %v68, 0
    %v83 = vsel %vm75, %v71, 0
    %v86 = vsel %vm75, %v72, 0
    %v89 = vsel %vm75, %v73, 0
    %v92 = vsel %vm75, %v74, 0
    %94 = vmatpush.xpose.msra.mxu0 0.0
    %95 = vmatpush.xpose.msra.mxu0 0.0
    %96 = vmatpush.xpose.msra.mxu0 0.0
    %97 = vmatpush.xpose.msra.mxu0 0.0
    %98 = vmatpush.xpose.msra.mxu0 0.0
    %99 = vmatpush.xpose.msra.mxu0 0.0
    %100 = vmatpush.xpose.msra.mxu0 0.0
    %101 = vmatpush.xpose.msra.mxu0 0.0
    %102 = vmatpush.xpose.msra.mxu0 0.0
    %103 = vmatpush.xpose.msra.mxu0 0.0
    %104 = vmatpush.xpose.msra.mxu0 0.0
    %105 = vmatpush.xpose.msra.mxu0 0.0
    %106 = vmatpush.xpose.msra.mxu0 %v92
    %107 = vmatpush.xpose.msra.mxu0 %v89
    %108 = vmatpush.xpose.msra.mxu0 %v86
    %109 = vmatpush.xpose.msra.mxu0 %v83
    %110 = vmatmul.f32.gmra.mxu0 %v77
    %v111 = vpop.f32.mrf.mxu0
    %v112 = vadd.f32 0.0, %v111
    %113 = vmatmul.f32.gmra.mxu0 %v80
    %v114 = vpop.f32.mrf.mxu0
    %v115 = vadd.f32 0.0, %v114
    %116 = vdwg.mxu0
    %v117 = vadd.f32 %v69, %v112
    %v118 = vadd.f32 %v70, %v115
    %119 = vst.msk [vmem:[#allocation2] sm:$0xff] %vm75, %v117
    %120 = vst.msk [vmem:[#allocation2 + $0x8] sm:$0xff] %vm75, %v118
    // Predicated region
    $region26: #{tpu_custom_call.1} parent=1 // pred_check
      %p121 = pneg %p60
    $region27: #{tpu_custom_call.1} parent=1 // pred_check_branch
      %123 = sbr.rel (%p121) target = $region29
    $region28: #{tpu_custom_call.1} parent=1 // pred_region
      %vm124 = vcmask 31744
      %125 = vst.msk [vmem:[#allocation3] sm:$0xff] %vm124, 0.0
      %126 = vst.msk [vmem:[#allocation3 + $0x8] sm:$0xff] %vm124, 0.0
    $region29: #{tpu_custom_call.1} parent=1 // pred_fallthru
      _
    %v127 = vld [vmem:[#allocation3] sm:$0xff]
    %v128 = vld [vmem:[#allocation3 + $0x8] sm:$0xff]
    %v129 = vld [vmem:[%s51] sm:$0xf]
    %v131 = vsel %vm75, %v129, 0
    %133 = vmatpush.xpose.msra.mxu0 0.0
    %134 = vmatpush.xpose.msra.mxu0 0.0
    %135 = vmatpush.xpose.msra.mxu0 0.0
    %136 = vmatpush.xpose.msra.mxu0 0.0
    %137 = vmatpush.xpose.msra.mxu0 0.0
    %138 = vmatpush.xpose.msra.mxu0 0.0
    %139 = vmatpush.xpose.msra.mxu0 0.0
    %140 = vmatpush.xpose.msra.mxu0 0.0
    %141 = vmatpush.xpose.msra.mxu0 0.0
    %142 = vmatpush.xpose.msra.mxu0 0.0
    %143 = vmatpush.xpose.msra.mxu0 0.0
    %144 = vmatpush.xpose.msra.mxu0 0.0
    %145 = vmatpush.xpose.msra.mxu0 0.0
    %146 = vmatpush.xpose.msra.mxu0 0.0
    %147 = vmatpush.xpose.msra.mxu0 0.0
    %148 = vmatpush.xpose.msra.mxu0 %v131
    %149 = vmatmul.f32.gmra.mxu0 %v77
    %v150 = vpop.f32.mrf.mxu0
    %v151 = vadd.f32 0.0, %v150
    %152 = vmatmul.f32.gmra.mxu0 %v80
    %v153 = vpop.f32.mrf.mxu0
    %v154 = vadd.f32 0.0, %v153
    %155 = vdwg.mxu0
    %v156 = vadd.f32 %v127, %v151
    %v157 = vadd.f32 %v128, %v154
    %vm158 = vcmask 31744
    %159 = vst.msk [vmem:[#allocation3] sm:$0xff] %vm158, %v156
    %160 = vst.msk [vmem:[#allocation3 + $0x8] sm:$0xff] %vm158, %v157
    // Predicated region
    $region30: #{tpu_custom_call.1} parent=1 // pred_check
      %p161 = pneg %p60
    $region31: #{tpu_custom_call.1} parent=1 // pred_check_branch
      %163 = sbr.rel (%p161) target = $region33
    $region32: #{tpu_custom_call.1} parent=1 // pred_region
      %v164 = vld [vmem:[#allocation3] sm:$0xff]
      %v165 = vld [vmem:[#allocation3 + $0x8] sm:$0xff]
      %v166 = vld [vmem:[%s58] sm:$0xff]
      %v167 = vld [vmem:[%s58 + $0x8] sm:$0xff]
      %v168 = vld [vmem:[%s58 + $0x10] sm:$0xff]
      %v169 = vld [vmem:[%s58 + $0x18] sm:$0xff]
      %v171 = vsel %vm158, %v164, 0
      %v174 = vsel %vm158, %v165, 0
      %v177 = vsel %vm158, %v166, 0
      %v180 = vsel %vm158, %v167, 0
      %v183 = vsel %vm158, %v168, 0
      %v186 = vsel %vm158, %v169, 0
      %188 = vmatpush.xpose.msra.mxu0 0.0
      %189 = vmatpush.xpose.msra.mxu0 0.0
      %190 = vmatpush.xpose.msra.mxu0 0.0
      %191 = vmatpush.xpose.msra.mxu0 0.0
      %192 = vmatpush.xpose.msra.mxu0 0.0
      %193 = vmatpush.xpose.msra.mxu0 0.0
      %194 = vmatpush.xpose.msra.mxu0 0.0
      %195 = vmatpush.xpose.msra.mxu0 0.0
      %196 = vmatpush.xpose.msra.mxu0 0.0
      %197 = vmatpush.xpose.msra.mxu0 0.0
      %198 = vmatpush.xpose.msra.mxu0 0.0
      %199 = vmatpush.xpose.msra.mxu0 0.0
      %200 = vmatpush.xpose.msra.mxu0 %v186
      %201 = vmatpush.xpose.msra.mxu0 %v183
      %202 = vmatpush.xpose.msra.mxu0 %v180
      %203 = vmatpush.xpose.msra.mxu0 %v177
      %204 = vmatmul.f32.gmra.mxu0 %v171
      %v205 = vpop.f32.mrf.mxu0
      %v206 = vadd.f32 0.0, %v205
      %207 = vmatmul.f32.gmra.mxu0 %v174
      %v208 = vpop.f32.mrf.mxu0
      %v209 = vadd.f32 0.0, %v208
      %210 = vdwg.mxu0
      %v211 = vld [vmem:[#allocation2] sm:$0xff]
      %v212 = vld [vmem:[#allocation2 + $0x8] sm:$0xff]
      %v213 = vld [vmem:[%s3] sm:$0x1]
      %v215 = vperm.slane %v213, 0
      %v217 = vadd.f32 %v211, %v215
      %v218 = vadd.f32 %v212, %v215
      %v219 = vadd.f32 %v217, %v206
      %v220 = vadd.f32 %v218, %v209
      %221 = vst.msk [vmem:[#allocation6] sm:$0xff] %vm75, %v219
      %222 = vst.msk [vmem:[#allocation6 + $0x8] sm:$0xff] %vm75, %v220
    $region33: #{tpu_custom_call.1} parent=1 // pred_fallthru
      _
    // Predicated region
    $region34: #{tpu_custom_call.1} parent=1 // pred_check
      _
    $region35: #{tpu_custom_call.1} parent=1 // pred_check_branch
      %224 = sbr.rel (0) target = $region37
    $region36: #{tpu_custom_call.1} parent=1 // pred_region
      %226 = vsyncadd [#allocation7], 0
      %s227 = sshll.u32 [#allocation6], 4
      %s228 = int_to_ptr.vmem [resolvable:$true] %s227
      %s229 = sshll.u32 %s6, 4
      %s230 = int_to_ptr.hbm [resolvable:$true] %s229
      %235 = dma.vmem_to_hbm [thread:$0]  %s228, 256, %s230, [#allocation7], 128, 128, 8
    $region37: #{tpu_custom_call.1} parent=1 // pred_fallthru
      _
    // Predicated region
    $region38: #{tpu_custom_call.1} parent=1 // pred_check
      _
    $region39: #{tpu_custom_call.1} parent=1 // pred_check_branch
      %237 = sbr.rel (0) target = $region41
    $region40: #{tpu_custom_call.1} parent=1 // pred_region
      %239 = dma.done [#allocation7], 256
    $region41: #{tpu_custom_call.1} parent=1 // pred_fallthru
      _
    %240 = vsyncpa [#allocation7], 1

</llo_original>
